<compile_context>
chip_gen: v7x
topology: tpu7x:2x2x1
jax: 0.10.0
libtpu: 0.0.40
codegen_flags: <defaults>
</compile_context>

<pallas_src>
import jax
import jax.numpy as jnp
from jax import lax
from jax.experimental import pallas as pl
from jax.experimental.pallas import tpu as pltpu

_EPS = 1e-5  # nn.BatchNorm2d default


def _make_kernel(nb, mid, H, W, base):
    S = H * W

    def kernel(x_ref, w1_ref, wdw_ref, w3_ref, b_ref, o_ref, pad_ref):
        # lane masks for the horizontal (w) image borders, built once per grid step
        col = lax.broadcasted_iota(jnp.int32, (mid, S), 1) % W
        mask_l = col >= 1          # reading (w - 1) stays inside the row
        mask_r = col <= (W - 2)    # reading (w + 1) stays inside the row

        # zero only the left/right pad slabs of the scratch (interior is fully
        # rewritten below; the pads are never written by the interior store)
        zeros_pad = jnp.zeros((mid, base), jnp.float32)
        pad_ref[:, pl.ds(0, base)] = zeros_pad
        pad_ref[:, pl.ds(base + S, base)] = zeros_pad

        b1 = b_ref[0]              # (mid, 1) folded-BN biases
        b2 = b_ref[1]
        b3 = b_ref[2]
        w1 = w1_ref[...]           # (mid, mid) BN-folded 1x1 weights
        w3 = w3_ref[...]

        for n in range(nb):
            x2 = x_ref[n, 0]                                    # (mid, S) channel-split half

            # conv1 (1x1, BN1 folded) + ReLU -> MXU matmul
            y1 = jnp.dot(w1, x2, preferred_element_type=jnp.float32)
            y1 = jnp.maximum(y1 + b1, 0.0)

            # stage conv1 output into the flat zero-padded scratch (aligned store)
            pad_ref[:, pl.ds(base, S)] = y1

            # depthwise 3x3, stride 1, pad 1 (BN2 folded into weights / b2)
            acc = jnp.zeros((mid, S), jnp.float32)
            for kh in range(3):
                dh = kh - 1
                for kw in range(3):
                    dw = kw - 1
                    tap = pad_ref[:, pl.ds(base + dh * W + dw, S)]
                    if dw == -1:
                        tap = jnp.where(mask_l, tap, 0.0)
                    elif dw == 1:
                        tap = jnp.where(mask_r, tap, 0.0)
                    acc = acc + wdw_ref[kh * 3 + kw] * tap      # (mid,1) * (mid,S)
            acc = acc + b2

            # conv3 (1x1, BN3 folded) + ReLU -> MXU matmul
            y3 = jnp.dot(w3, acc, preferred_element_type=jnp.float32)
            y3 = jnp.maximum(y3 + b3, 0.0)
            o_ref[n] = y3.astype(o_ref.dtype)

    return kernel


def shufflenetv2_unit(x, w1, wdw, w3, bn1, bn2, bn3, *, images_per_step=1):
    """stride=1 / downsample=None ShuffleNetV2 unit. x: (N, C, H, W) with C even."""
    N, C, H, W = x.shape
    mid = C // 2
    S = H * W
    assert C == 2 * mid and N % images_per_step == 0
    nb = images_per_step

    def fold(params):
        gamma, beta, mean, var = params
        scale = gamma / jnp.sqrt(var + _EPS)
        return scale, beta - mean * scale

    s1, b1 = fold(bn1)
    s2, b2 = fold(bn2)
    s3, b3 = fold(bn3)

    # fold BN scales into the conv weights (one-time wrapper-side XLA work)
    w1f = (s1[:, None] * w1).astype(jnp.float32)                       # (mid, mid)
    w3f = (s3[:, None] * w3).astype(jnp.float32)                       # (mid, mid)
    wdwf = (s2[:, None, None] * wdw.reshape(mid, 3, 3)).reshape(mid, 9)
    wdwf = wdwf.T.reshape(9, mid, 1).astype(jnp.float32)               # (9, mid, 1)
    biases = jnp.stack([b1, b2, b3], axis=0).reshape(3, mid, 1).astype(jnp.float32)

    # lane-dense layout: (N, 2, mid, S) so the channel-split half is block-indexable
    x_r = x.astype(jnp.float32).reshape(N, 2, mid, S)

    base = -(-(W + 1) // 128) * 128          # 128-aligned zero-pad width (>= W + 1)

    branch = pl.pallas_call(
        _make_kernel(nb, mid, H, W, base),
        out_shape=jax.ShapeDtypeStruct((N, mid, S), jnp.float32),
        grid=(N // nb,),
        in_specs=[
            pl.BlockSpec((nb, 1, mid, S), lambda n: (n, 1, 0, 0)),  # x2 half only
            pl.BlockSpec((mid, mid), lambda n: (0, 0)),             # conv1 weights (VMEM)
            pl.BlockSpec((9, mid, 1), lambda n: (0, 0, 0)),         # depthwise taps
            pl.BlockSpec((mid, mid), lambda n: (0, 0)),             # conv3 weights (VMEM)
            pl.BlockSpec((3, mid, 1), lambda n: (0, 0, 0)),         # folded BN biases
        ],
        out_specs=pl.BlockSpec((nb, mid, S), lambda n: (n, 0, 0)),
        scratch_shapes=[pltpu.VMEM((mid, S + 2 * base), jnp.float32)],
        compiler_params=pltpu.CompilerParams(dimension_semantics=("parallel",)),
    )(x_r, w1f, wdwf, w3f, biases)

    # concat((x1, branch), dim=1) + channel_shuffle(groups=2):
    #   out[:, 2o] = x1[o], out[:, 2o+1] = branch[o]  -> pure layout plumbing in XLA
    x1 = x_r[:, 0]                                     # (N, mid, S)
    out = jnp.stack([x1, branch], axis=2)              # (N, mid, 2, S)
    return out.reshape(N, C, H, W)


def reference(x, w1, wdw, w3, bn1, bn2, bn3):
    """Pure-JAX reference replicating the PyTorch forward (eval-mode BN)."""
    N, C, H, W = x.shape
    mid = C // 2

    def bn(y, params):
        gamma, beta, mean, var = params
        scale = gamma / jnp.sqrt(var + _EPS)
        bias = beta - mean * scale
        return y * scale[None, :, None, None] + bias[None, :, None, None]

    x1, x2 = x[:, :mid], x[:, mid:]
    out = jnp.einsum('oc,nchw->nohw', w1, x2)
    out = jax.nn.relu(bn(out, bn1))
    out = lax.conv_general_dilated(out, wdw.reshape(mid, 1, 3, 3),
                                   window_strides=(1, 1),
                                   padding=((1, 1), (1, 1)),
                                   dimension_numbers=('NCHW', 'OIHW', 'NCHW'),
                                   feature_group_count=mid)
    out = bn(out, bn2)
    out = jnp.einsum('oc,nchw->nohw', w3, out)
    out = jax.nn.relu(bn(out, bn3))
    cat = jnp.concatenate([x1, out], axis=1)
    # channel_shuffle(cat, groups=2)
    return cat.reshape(N, 2, mid, H, W).transpose(0, 2, 1, 3, 4).reshape(N, C, H, W)


if __name__ == "__main__":
    N, C, H, W = 2, 8, 16, 16          # in_channels == out_channels == 8, stride=1
    mid = C // 2

    key = jax.random.PRNGKey(0)
    ks = jax.random.split(key, 8)
    x = jax.random.normal(ks[0], (N, C, H, W), jnp.float32)

    # conv weights (PyTorch shapes: (mid, mid, 1, 1), (mid, 1, 3, 3), (mid, mid, 1, 1))
    w1 = jax.random.normal(ks[1], (mid, mid), jnp.float32) * 0.2
    wdw = jax.random.normal(ks[2], (mid, 3, 3), jnp.float32) * 0.2
    w3 = jax.random.normal(ks[3], (mid, mid), jnp.float32) * 0.2

    def make_bn(k):
        ka, kb, kc, kd = jax.random.split(k, 4)
        gamma = 0.5 + jax.random.uniform(ka, (mid,), jnp.float32)
        beta = jax.random.normal(kb, (mid,), jnp.float32) * 0.1
        mean = jax.random.normal(kc, (mid,), jnp.float32) * 0.1
        var = 0.5 + jax.random.uniform(kd, (mid,), jnp.float32)
        return (gamma, beta, mean, var)

    bn1, bn2, bn3 = make_bn(ks[4]), make_bn(ks[5]), make_bn(ks[6])

    out = jax.block_until_ready(shufflenetv2_unit(x, w1, wdw, w3, bn1, bn2, bn3))
    ref = reference(x, w1, wdw, w3, bn1, bn2, bn3)

    assert out.shape == (N, C, H, W)
    err = jnp.max(jnp.abs(out - ref))
    assert jnp.allclose(out, ref, atol=1e-4, rtol=1e-4), f"max abs err = {err}"
    print("KERNEL_OK")
</pallas_src>

<mosaic_0001>
module attributes {stable_mosaic.version = 11 : i64} {
  func.func @kernel(%arg0: i32, %arg1: memref<1x1x4x256xf32, #tpu.memory_space<vmem>>, %arg2: memref<4x4xf32, #tpu.memory_space<vmem>>, %arg3: memref<9x4x1xf32, #tpu.memory_space<vmem>>, %arg4: memref<4x4xf32, #tpu.memory_space<vmem>>, %arg5: memref<3x4x1xf32, #tpu.memory_space<vmem>>, %arg6: memref<1x4x256xf32, #tpu.memory_space<vmem>>, %arg7: memref<4x512xf32, #tpu.memory_space<vmem>>) attributes {dimension_semantics = [#tpu.dimension_semantics<parallel>], iteration_bounds = array<i64: 2>, scalar_prefetch = 0 : i64, scratch_operands = 1 : i64, tpu.core_type = #tpu.core_type<tc>, window_params = [{transform_indices = @transform_0, window_bounds = array<i64: 1, 1, 4, 256>}, {pipeline_mode = #tpu.pipeline_mode<synchronous>, transform_indices = @transform_1, window_bounds = array<i64: 4, 4>}, {pipeline_mode = #tpu.pipeline_mode<synchronous>, transform_indices = @transform_2, window_bounds = array<i64: 9, 4, 1>}, {pipeline_mode = #tpu.pipeline_mode<synchronous>, transform_indices = @transform_3, window_bounds = array<i64: 4, 4>}, {pipeline_mode = #tpu.pipeline_mode<synchronous>, transform_indices = @transform_4, window_bounds = array<i64: 3, 4, 1>}, {transform_indices = @transform_5, window_bounds = array<i64: 1, 4, 256>}]} {
    %0 = tpu.iota {dimensions = array<i32: 1>} : vector<4x256xi32>
    %c16_i32 = arith.constant 16 : i32
    %c0_i32 = arith.constant 0 : i32
    %1 = arith.cmpi eq, %c16_i32, %c0_i32 : i32
    %c1_i32 = arith.constant 1 : i32
    %2 = arith.select %1, %c1_i32, %c16_i32 : i32
    %3 = vector.broadcast %2 : i32 to vector<4x256xi32>
    %4 = arith.remsi %0, %3 : vector<4x256xi32>
    %c0_i32_0 = arith.constant 0 : i32
    %5 = vector.broadcast %c0_i32_0 : i32 to vector<4x256xi32>
    %6 = arith.cmpi ne, %4, %5 : vector<4x256xi32>
    %c0_i32_1 = arith.constant 0 : i32
    %7 = vector.broadcast %c0_i32_1 : i32 to vector<4x256xi32>
    %8 = arith.cmpi slt, %4, %7 : vector<4x256xi32>
    %c0_i32_2 = arith.constant 0 : i32
    %9 = arith.cmpi slt, %2, %c0_i32_2 : i32
    %10 = vector.broadcast %9 : i1 to vector<4x256xi1>
    %11 = vector.broadcast %10 : vector<4x256xi1> to vector<4x256xi1>
    %12 = arith.xori %8, %11 : vector<4x256xi1>
    %13 = arith.andi %12, %6 : vector<4x256xi1>
    %14 = vector.broadcast %2 : i32 to vector<4x256xi32>
    %15 = arith.addi %4, %14 : vector<4x256xi32>
    %16 = arith.select %13, %15, %4 : vector<4x256xi1>, vector<4x256xi32>
    %c1_i32_3 = arith.constant 1 : i32
    %17 = vector.broadcast %c1_i32_3 : i32 to vector<4x256xi32>
    %18 = arith.cmpi sge, %16, %17 : vector<4x256xi32>
    %c14_i32 = arith.constant 14 : i32
    %19 = vector.broadcast %c14_i32 : i32 to vector<4x256xi32>
    %20 = arith.cmpi sle, %16, %19 : vector<4x256xi32>
    %cst = arith.constant 0.000000e+00 : f32
    %21 = vector.broadcast %cst : f32 to vector<4x128xf32>
    %c0 = arith.constant 0 : index
    %c0_4 = arith.constant 0 : index
    %22 = vector.load %arg7[%c0, %c0_4] : memref<4x512xf32, #tpu.memory_space<vmem>>, vector<4x128xf32>
    tpu.vector_store %arg7[%c0, %c0_4], %21 {strides = array<i32>} : memref<4x512xf32, #tpu.memory_space<vmem>>, vector<4x128xf32>,
    %c0_5 = arith.constant 0 : index
    %c384 = arith.constant 384 : index
    %23 = vector.load %arg7[%c0_5, %c384] : memref<4x512xf32, #tpu.memory_space<vmem>>, vector<4x128xf32>
    tpu.vector_store %arg7[%c0_5, %c384], %21 {strides = array<i32>} : memref<4x512xf32, #tpu.memory_space<vmem>>, vector<4x128xf32>,
    %c0_6 = arith.constant 0 : index
    %c0_7 = arith.constant 0 : index
    %c0_8 = arith.constant 0 : index
    %24 = vector.load %arg5[%c0_6, %c0_7, %c0_8] : memref<3x4x1xf32, #tpu.memory_space<vmem>>, vector<1x4x1xf32>
    %25 = vector.shape_cast %24 : vector<1x4x1xf32> to vector<4x1xf32>
    %c1 = arith.constant 1 : index
    %c0_9 = arith.constant 0 : index
    %c0_10 = arith.constant 0 : index
    %26 = vector.load %arg5[%c1, %c0_9, %c0_10] : memref<3x4x1xf32, #tpu.memory_space<vmem>>, vector<1x4x1xf32>
    %27 = vector.shape_cast %26 : vector<1x4x1xf32> to vector<4x1xf32>
    %c2 = arith.constant 2 : index
    %c0_11 = arith.constant 0 : index
    %c0_12 = arith.constant 0 : index
    %28 = vector.load %arg5[%c2, %c0_11, %c0_12] : memref<3x4x1xf32, #tpu.memory_space<vmem>>, vector<1x4x1xf32>
    %29 = vector.shape_cast %28 : vector<1x4x1xf32> to vector<4x1xf32>
    %c0_13 = arith.constant 0 : index
    %c0_14 = arith.constant 0 : index
    %30 = vector.load %arg2[%c0_13, %c0_14] : memref<4x4xf32, #tpu.memory_space<vmem>>, vector<4x4xf32>
    %c0_15 = arith.constant 0 : index
    %c0_16 = arith.constant 0 : index
    %31 = vector.load %arg4[%c0_15, %c0_16] : memref<4x4xf32, #tpu.memory_space<vmem>>, vector<4x4xf32>
    %c0_17 = arith.constant 0 : index
    %c0_18 = arith.constant 0 : index
    %c0_19 = arith.constant 0 : index
    %c0_20 = arith.constant 0 : index
    %32 = vector.load %arg1[%c0_17, %c0_18, %c0_19, %c0_20] : memref<1x1x4x256xf32, #tpu.memory_space<vmem>>, vector<1x1x4x256xf32>
    %33 = vector.shape_cast %32 : vector<1x1x4x256xf32> to vector<4x256xf32>
    %cst_21 = arith.constant dense<0.000000e+00> : vector<4x256xf32>
    %34 = tpu.matmul %30, %33, %cst_21 {dimension_numbers = #tpu.dot_dimension_numbers<[1], [0], [0], [1], [0, 0, 1, 1], [], []>} : vector<4x4xf32>, vector<4x256xf32>, vector<4x256xf32> -> vector<4x256xf32>
    %35 = vector.broadcast %25 : vector<4x1xf32> to vector<4x256xf32>
    %36 = arith.addf %34, %35 : vector<4x256xf32>
    %cst_22 = arith.constant 0.000000e+00 : f32
    %37 = vector.broadcast %cst_22 : f32 to vector<4x256xf32>
    %38 = arith.maximumf %36, %37 : vector<4x256xf32>
    %c0_23 = arith.constant 0 : index
    %c128 = arith.constant 128 : index
    %39 = vector.load %arg7[%c0_23, %c128] : memref<4x512xf32, #tpu.memory_space<vmem>>, vector<4x256xf32>
    tpu.vector_store %arg7[%c0_23, %c128], %38 {strides = array<i32>} : memref<4x512xf32, #tpu.memory_space<vmem>>, vector<4x256xf32>,
    %cst_24 = arith.constant 0.000000e+00 : f32
    %40 = vector.broadcast %cst_24 : f32 to vector<4x256xf32>
    %c0_25 = arith.constant 0 : index
    %c111 = arith.constant 111 : index
    %41 = vector.load %arg7[%c0_25, %c111] : memref<4x512xf32, #tpu.memory_space<vmem>>, vector<4x256xf32>
    %cst_26 = arith.constant 0.000000e+00 : f32
    %42 = vector.broadcast %cst_26 : f32 to vector<4x256xf32>
    %43 = arith.select %18, %41, %42 : vector<4x256xi1>, vector<4x256xf32>
    %c0_27 = arith.constant 0 : index
    %c0_28 = arith.constant 0 : index
    %c0_29 = arith.constant 0 : index
    %44 = vector.load %arg3[%c0_27, %c0_28, %c0_29] : memref<9x4x1xf32, #tpu.memory_space<vmem>>, vector<1x4x1xf32>
    %45 = vector.shape_cast %44 : vector<1x4x1xf32> to vector<4x1xf32>
    %46 = vector.broadcast %45 : vector<4x1xf32> to vector<4x256xf32>
    %47 = arith.mulf %46, %43 : vector<4x256xf32>
    %48 = arith.addf %40, %47 : vector<4x256xf32>
    %c0_30 = arith.constant 0 : index
    %c112 = arith.constant 112 : index
    %49 = vector.load %arg7[%c0_30, %c112] : memref<4x512xf32, #tpu.memory_space<vmem>>, vector<4x256xf32>
    %c1_31 = arith.constant 1 : index
    %c0_32 = arith.constant 0 : index
    %c0_33 = arith.constant 0 : index
    %50 = vector.load %arg3[%c1_31, %c0_32, %c0_33] : memref<9x4x1xf32, #tpu.memory_space<vmem>>, vector<1x4x1xf32>
    %51 = vector.shape_cast %50 : vector<1x4x1xf32> to vector<4x1xf32>
    %52 = vector.broadcast %51 : vector<4x1xf32> to vector<4x256xf32>
    %53 = arith.mulf %52, %49 : vector<4x256xf32>
    %54 = arith.addf %48, %53 : vector<4x256xf32>
    %c0_34 = arith.constant 0 : index
    %c113 = arith.constant 113 : index
    %55 = vector.load %arg7[%c0_34, %c113] : memref<4x512xf32, #tpu.memory_space<vmem>>, vector<4x256xf32>
    %cst_35 = arith.constant 0.000000e+00 : f32
    %56 = vector.broadcast %cst_35 : f32 to vector<4x256xf32>
    %57 = arith.select %20, %55, %56 : vector<4x256xi1>, vector<4x256xf32>
    %c2_36 = arith.constant 2 : index
    %c0_37 = arith.constant 0 : index
    %c0_38 = arith.constant 0 : index
    %58 = vector.load %arg3[%c2_36, %c0_37, %c0_38] : memref<9x4x1xf32, #tpu.memory_space<vmem>>, vector<1x4x1xf32>
    %59 = vector.shape_cast %58 : vector<1x4x1xf32> to vector<4x1xf32>
    %60 = vector.broadcast %59 : vector<4x1xf32> to vector<4x256xf32>
    %61 = arith.mulf %60, %57 : vector<4x256xf32>
    %62 = arith.addf %54, %61 : vector<4x256xf32>
    %c0_39 = arith.constant 0 : index
    %c127 = arith.constant 127 : index
    %63 = vector.load %arg7[%c0_39, %c127] : memref<4x512xf32, #tpu.memory_space<vmem>>, vector<4x256xf32>
    %cst_40 = arith.constant 0.000000e+00 : f32
    %64 = vector.broadcast %cst_40 : f32 to vector<4x256xf32>
    %65 = arith.select %18, %63, %64 : vector<4x256xi1>, vector<4x256xf32>
    %c3 = arith.constant 3 : index
    %c0_41 = arith.constant 0 : index
    %c0_42 = arith.constant 0 : index
    %66 = vector.load %arg3[%c3, %c0_41, %c0_42] : memref<9x4x1xf32, #tpu.memory_space<vmem>>, vector<1x4x1xf32>
    %67 = vector.shape_cast %66 : vector<1x4x1xf32> to vector<4x1xf32>
    %68 = vector.broadcast %67 : vector<4x1xf32> to vector<4x256xf32>
    %69 = arith.mulf %68, %65 : vector<4x256xf32>
    %70 = arith.addf %62, %69 : vector<4x256xf32>
    %c0_43 = arith.constant 0 : index
    %c128_44 = arith.constant 128 : index
    %71 = vector.load %arg7[%c0_43, %c128_44] : memref<4x512xf32, #tpu.memory_space<vmem>>, vector<4x256xf32>
    %c4 = arith.constant 4 : index
    %c0_45 = arith.constant 0 : index
    %c0_46 = arith.constant 0 : index
    %72 = vector.load %arg3[%c4, %c0_45, %c0_46] : memref<9x4x1xf32, #tpu.memory_space<vmem>>, vector<1x4x1xf32>
    %73 = vector.shape_cast %72 : vector<1x4x1xf32> to vector<4x1xf32>
    %74 = vector.broadcast %73 : vector<4x1xf32> to vector<4x256xf32>
    %75 = arith.mulf %74, %71 : vector<4x256xf32>
    %76 = arith.addf %70, %75 : vector<4x256xf32>
    %c0_47 = arith.constant 0 : index
    %c129 = arith.constant 129 : index
    %77 = vector.load %arg7[%c0_47, %c129] : memref<4x512xf32, #tpu.memory_space<vmem>>, vector<4x256xf32>
    %cst_48 = arith.constant 0.000000e+00 : f32
    %78 = vector.broadcast %cst_48 : f32 to vector<4x256xf32>
    %79 = arith.select %20, %77, %78 : vector<4x256xi1>, vector<4x256xf32>
    %c5 = arith.constant 5 : index
    %c0_49 = arith.constant 0 : index
    %c0_50 = arith.constant 0 : index
    %80 = vector.load %arg3[%c5, %c0_49, %c0_50] : memref<9x4x1xf32, #tpu.memory_space<vmem>>, vector<1x4x1xf32>
    %81 = vector.shape_cast %80 : vector<1x4x1xf32> to vector<4x1xf32>
    %82 = vector.broadcast %81 : vector<4x1xf32> to vector<4x256xf32>
    %83 = arith.mulf %82, %79 : vector<4x256xf32>
    %84 = arith.addf %76, %83 : vector<4x256xf32>
    %c0_51 = arith.constant 0 : index
    %c143 = arith.constant 143 : index
    %85 = vector.load %arg7[%c0_51, %c143] : memref<4x512xf32, #tpu.memory_space<vmem>>, vector<4x256xf32>
    %cst_52 = arith.constant 0.000000e+00 : f32
    %86 = vector.broadcast %cst_52 : f32 to vector<4x256xf32>
    %87 = arith.select %18, %85, %86 : vector<4x256xi1>, vector<4x256xf32>
    %c6 = arith.constant 6 : index
    %c0_53 = arith.constant 0 : index
    %c0_54 = arith.constant 0 : index
    %88 = vector.load %arg3[%c6, %c0_53, %c0_54] : memref<9x4x1xf32, #tpu.memory_space<vmem>>, vector<1x4x1xf32>
    %89 = vector.shape_cast %88 : vector<1x4x1xf32> to vector<4x1xf32>
    %90 = vector.broadcast %89 : vector<4x1xf32> to vector<4x256xf32>
    %91 = arith.mulf %90, %87 : vector<4x256xf32>
    %92 = arith.addf %84, %91 : vector<4x256xf32>
    %c0_55 = arith.constant 0 : index
    %c144 = arith.constant 144 : index
    %93 = vector.load %arg7[%c0_55, %c144] : memref<4x512xf32, #tpu.memory_space<vmem>>, vector<4x256xf32>
    %c7 = arith.constant 7 : index
    %c0_56 = arith.constant 0 : index
    %c0_57 = arith.constant 0 : index
    %94 = vector.load %arg3[%c7, %c0_56, %c0_57] : memref<9x4x1xf32, #tpu.memory_space<vmem>>, vector<1x4x1xf32>
    %95 = vector.shape_cast %94 : vector<1x4x1xf32> to vector<4x1xf32>
    %96 = vector.broadcast %95 : vector<4x1xf32> to vector<4x256xf32>
    %97 = arith.mulf %96, %93 : vector<4x256xf32>
    %98 = arith.addf %92, %97 : vector<4x256xf32>
    %c0_58 = arith.constant 0 : index
    %c145 = arith.constant 145 : index
    %99 = vector.load %arg7[%c0_58, %c145] : memref<4x512xf32, #tpu.memory_space<vmem>>, vector<4x256xf32>
    %cst_59 = arith.constant 0.000000e+00 : f32
    %100 = vector.broadcast %cst_59 : f32 to vector<4x256xf32>
    %101 = arith.select %20, %99, %100 : vector<4x256xi1>, vector<4x256xf32>
    %c8 = arith.constant 8 : index
    %c0_60 = arith.constant 0 : index
    %c0_61 = arith.constant 0 : index
    %102 = vector.load %arg3[%c8, %c0_60, %c0_61] : memref<9x4x1xf32, #tpu.memory_space<vmem>>, vector<1x4x1xf32>
    %103 = vector.shape_cast %102 : vector<1x4x1xf32> to vector<4x1xf32>
    %104 = vector.broadcast %103 : vector<4x1xf32> to vector<4x256xf32>
    %105 = arith.mulf %104, %101 : vector<4x256xf32>
    %106 = arith.addf %98, %105 : vector<4x256xf32>
    %107 = vector.broadcast %27 : vector<4x1xf32> to vector<4x256xf32>
    %108 = arith.addf %106, %107 : vector<4x256xf32>
    %cst_62 = arith.constant dense<0.000000e+00> : vector<4x256xf32>
    %109 = tpu.matmul %31, %108, %cst_62 {dimension_numbers = #tpu.dot_dimension_numbers<[1], [0], [0], [1], [0, 0, 1, 1], [], []>} : vector<4x4xf32>, vector<4x256xf32>, vector<4x256xf32> -> vector<4x256xf32>
    %110 = vector.broadcast %29 : vector<4x1xf32> to vector<4x256xf32>
    %111 = arith.addf %109, %110 : vector<4x256xf32>
    %cst_63 = arith.constant 0.000000e+00 : f32
    %112 = vector.broadcast %cst_63 : f32 to vector<4x256xf32>
    %113 = arith.maximumf %111, %112 : vector<4x256xf32>
    %c0_64 = arith.constant 0 : index
    %c0_65 = arith.constant 0 : index
    %c0_66 = arith.constant 0 : index
    %114 = vector.load %arg6[%c0_64, %c0_65, %c0_66] : memref<1x4x256xf32, #tpu.memory_space<vmem>>, vector<1x4x256xf32>
    %115 = vector.shape_cast %114 : vector<1x4x256xf32> to vector<4x256xf32>
    %116 = vector.shape_cast %113 : vector<4x256xf32> to vector<1x4x256xf32>
    tpu.vector_store %arg6[%c0_64, %c0_65, %c0_66], %116 {strides = array<i32>} : memref<1x4x256xf32, #tpu.memory_space<vmem>>, vector<1x4x256xf32>,
    return
  }
  func.func @transform_0(%arg0: i32) -> (i32, i32, i32, i32) {
    %c1_i32 = arith.constant 1 : i32
    %c0_i32 = arith.constant 0 : i32
    %c0_i32_0 = arith.constant 0 : i32
    %c0_i32_1 = arith.constant 0 : i32
    return %arg0, %c1_i32, %c0_i32, %c0_i32_0 : i32, i32, i32, i32
  }
  func.func @transform_1(%arg0: i32) -> (i32, i32) {
    %c0_i32 = arith.constant 0 : i32
    %c0_i32_0 = arith.constant 0 : i32
    %c0_i32_1 = arith.constant 0 : i32
    return %c0_i32, %c0_i32_0 : i32, i32
  }
  func.func @transform_2(%arg0: i32) -> (i32, i32, i32) {
    %c0_i32 = arith.constant 0 : i32
    %c0_i32_0 = arith.constant 0 : i32
    %c0_i32_1 = arith.constant 0 : i32
    %c0_i32_2 = arith.constant 0 : i32
    return %c0_i32, %c0_i32_0, %c0_i32_1 : i32, i32, i32
  }
  func.func @transform_3(%arg0: i32) -> (i32, i32) {
    %c0_i32 = arith.constant 0 : i32
    %c0_i32_0 = arith.constant 0 : i32
    %c0_i32_1 = arith.constant 0 : i32
    return %c0_i32, %c0_i32_0 : i32, i32
  }
  func.func @transform_4(%arg0: i32) -> (i32, i32, i32) {
    %c0_i32 = arith.constant 0 : i32
    %c0_i32_0 = arith.constant 0 : i32
    %c0_i32_1 = arith.constant 0 : i32
    %c0_i32_2 = arith.constant 0 : i32
    return %c0_i32, %c0_i32_0, %c0_i32_1 : i32, i32, i32
  }
  func.func @transform_5(%arg0: i32) -> (i32, i32, i32) {
    %c0_i32 = arith.constant 0 : i32
    %c0_i32_0 = arith.constant 0 : i32
    %c0_i32_1 = arith.constant 0 : i32
    return %arg0, %c0_i32, %c0_i32_0 : i32, i32, i32
  }
}

</mosaic_0001>

<llo_original>
// kernel: tpu_custom_call.1
$region0: #{tpu_custom_call.1}
  #allocation0 [shape = 'u32[]', space=smem, size = 0x4, offset = 0x4, fixed_abs, tag = 'smem constant byte address 0x4 - core index']
  #allocation1 [shape = 'u32[144,128]{1,0:T(1,128)}', space=vmem, size = 0x12000, scoped, tag = 'internal scratch']
  #allocation2 [shape = 'f32[4,512]{1,0:T(4,128)}', space=vmem, size = 0x2000, scoped, tag = 'scratch operand']
  %s0 = inlined_call_operand.vmem [shape: f32[2,2,4,256], index: 0, kind: input, shape index: {}]
  %s1 = inlined_call_operand.vmem [shape: f32[4,4], index: 1, kind: input, shape index: {}]
  %s2 = inlined_call_operand.vmem [shape: f32[9,4,1], index: 2, kind: input, shape index: {}]
  %s3 = inlined_call_operand.vmem [shape: f32[4,4], index: 3, kind: input, shape index: {}]
  %s4 = inlined_call_operand.vmem [shape: f32[3,4,1], index: 4, kind: input, shape index: {}]
  %s5 = inlined_call_operand.hbm [shape: f32[2,4,256], index: 5, kind: output, shape index: {}]
  %s6 = sld [smem:[#allocation0]]
  $region53: #{tpu_custom_call.1} parent=0
    _
  %s8 = ssub.s32 1, %s6
  %s9 = scalar_select 0, %s8, %s6
  $region1: #{tpu_custom_call.1} parent=0
    #allocation3 [shape = 'u8[8192]{0}', space=vmem, size = 0x2000, scoped, tag = 'output window, operand 0']
    #allocation4 [shape = 's32[2]{0}', space=sflag, size = 0x8, scoped, tag = 'scoped memory for tpu_custom_call.1']
    %10 = vsyncpa [#allocation4], 0
    %s11 = scalar_lea.sflag [#allocation4], 1
    %12 = vsyncpa %s11, 0
    loop: start=0, step=1, limit=4
    $region2: #{tpu_custom_call.1} parent=1 // loop_pre_header
      _
    $region3: #{tpu_custom_call.1} parent=1 // loop_header
      %s14 = sphi 0, %s18
      %p15 = scmp.ge.s32.totalorder %s14, 4
      %s24 = sphi 0, %s26
      %s27 = sphi 0, %s24
      %s28 = sphi 0, %s27
      %s44 = sphi 0, %s28
      %s48 = sphi 0, %s48
      %s50 = sphi 0, %s48
      %s51 = sphi 0, %s50
      %s65 = sphi 0, %s51
      %s69 = sphi 0, %s69
      %s71 = sphi 0, %s69
      %s72 = sphi 0, %s71
      %s86 = sphi 0, %s72
      %s90 = sphi 0, %s90
      %s92 = sphi 0, %s90
      %s93 = sphi 0, %s92
      %s107 = sphi 0, %s93
      %s111 = sphi 0, %s111
      %s113 = sphi 0, %s111
      %s114 = sphi 0, %s113
      %s128 = sphi 0, %s114
      %s134 = sphi 0, %s136
      %s137 = sphi 0, %s134
      %s138 = sphi 0, %s137
      %s154 = sphi 0, %s138
    $region4: #{tpu_custom_call.1} parent=1 // loop_header_branch
      %17 = sbr.rel (%p15) target = $region8
    $region5: #{tpu_custom_call.1} parent=1 // loop_body
      %s19 = ssub.s32 %s14, 1
      %s20 = ssub.s32 %s14, 2
      %s21 = sadd.s32 %s14, 1
      %s22 = ssub.s32 %s14, %s21
      %p23 = scmp.eq.s32.totalorder %s22, 0
      %s25 = sadd.s32 %s24, 1
      %s26 = scalar_select %p23, %s24, %s25
      %p29 = pneg %p23
      %p30 = scmp.eq.s32.totalorder %s14, 1
      %p31 = por %p29, %p30
      %p32 = scmp.ne.s32.totalorder %s24, %s27
      %p33 = scmp.eq.s32.totalorder %s14, 0
      %p34 = por %p32, %p33
      %p35 = scmp.ne.s32.totalorder %s24, %s27
      %p36 = scmp.eq.s32.totalorder %s19, 1
      %p37 = por %p35, %p36
      %p38 = scmp.ne.s32.totalorder %s27, %s28
      %p39 = scmp.eq.s32.totalorder %s19, 0
      %p40 = por %p38, %p39
      %p41 = scmp.ne.s32.totalorder %s27, %s28
      %p42 = scmp.eq.s32.totalorder %s20, 1
      %p43 = por %p41, %p42
      %p45 = scmp.ne.s32.totalorder %s28, %s44
      %p46 = scmp.eq.s32.totalorder %s20, 0
      %p47 = por %p45, %p46
      %s49 = sadd.s32 %s48, 1
      %p52 = scmp.eq.s32.totalorder %s14, 1
      %p53 = scmp.ne.s32.totalorder %s48, %s50
      %p54 = scmp.eq.s32.totalorder %s14, 0
      %p55 = por %p53, %p54
      %p56 = scmp.ne.s32.totalorder %s48, %s50
      %p57 = scmp.eq.s32.totalorder %s19, 1
      %p58 = por %p56, %p57
      %p59 = scmp.ne.s32.totalorder %s50, %s51
      %p60 = scmp.eq.s32.totalorder %s19, 0
      %p61 = por %p59, %p60
      %p62 = scmp.ne.s32.totalorder %s50, %s51
      %p63 = scmp.eq.s32.totalorder %s20, 1
      %p64 = por %p62, %p63
      %p66 = scmp.ne.s32.totalorder %s51, %s65
      %p67 = scmp.eq.s32.totalorder %s20, 0
      %p68 = por %p66, %p67
      %s70 = sadd.s32 %s69, 1
      %p73 = scmp.eq.s32.totalorder %s14, 1
      %p74 = scmp.ne.s32.totalorder %s69, %s71
      %p75 = scmp.eq.s32.totalorder %s14, 0
      %p76 = por %p74, %p75
      %p77 = scmp.ne.s32.totalorder %s69, %s71
      %p78 = scmp.eq.s32.totalorder %s19, 1
      %p79 = por %p77, %p78
      %p80 = scmp.ne.s32.totalorder %s71, %s72
      %p81 = scmp.eq.s32.totalorder %s19, 0
      %p82 = por %p80, %p81
      %p83 = scmp.ne.s32.totalorder %s71, %s72
      %p84 = scmp.eq.s32.totalorder %s20, 1
      %p85 = por %p83, %p84
      %p87 = scmp.ne.s32.totalorder %s72, %s86
      %p88 = scmp.eq.s32.totalorder %s20, 0
      %p89 = por %p87, %p88
      %s91 = sadd.s32 %s90, 1
      %p94 = scmp.eq.s32.totalorder %s14, 1
      %p95 = scmp.ne.s32.totalorder %s90, %s92
      %p96 = scmp.eq.s32.totalorder %s14, 0
      %p97 = por %p95, %p96
      %p98 = scmp.ne.s32.totalorder %s90, %s92
      %p99 = scmp.eq.s32.totalorder %s19, 1
      %p100 = por %p98, %p99
      %p101 = scmp.ne.s32.totalorder %s92, %s93
      %p102 = scmp.eq.s32.totalorder %s19, 0
      %p103 = por %p101, %p102
      %p104 = scmp.ne.s32.totalorder %s92, %s93
      %p105 = scmp.eq.s32.totalorder %s20, 1
      %p106 = por %p104, %p105
      %p108 = scmp.ne.s32.totalorder %s93, %s107
      %p109 = scmp.eq.s32.totalorder %s20, 0
      %p110 = por %p108, %p109
      %s112 = sadd.s32 %s111, 1
      %p115 = scmp.eq.s32.totalorder %s14, 1
      %p116 = scmp.ne.s32.totalorder %s111, %s113
      %p117 = scmp.eq.s32.totalorder %s14, 0
      %p118 = por %p116, %p117
      %p119 = scmp.ne.s32.totalorder %s111, %s113
      %p120 = scmp.eq.s32.totalorder %s19, 1
      %p121 = por %p119, %p120
      %p122 = scmp.ne.s32.totalorder %s113, %s114
      %p123 = scmp.eq.s32.totalorder %s19, 0
      %p124 = por %p122, %p123
      %p125 = scmp.ne.s32.totalorder %s113, %s114
      %p126 = scmp.eq.s32.totalorder %s20, 1
      %p127 = por %p125, %p126
      %p129 = scmp.ne.s32.totalorder %s114, %s128
      %p130 = scmp.eq.s32.totalorder %s20, 0
      %p131 = por %p129, %p130
      %s132 = ssub.s32 %s14, %s21
      %p133 = scmp.eq.s32.totalorder %s132, 0
      %s135 = sadd.s32 %s134, 1
      %s136 = scalar_select %p133, %s134, %s135
      %p139 = pneg %p133
      %p140 = scmp.eq.s32.totalorder %s14, 1
      %p141 = por %p139, %p140
      %p142 = scmp.ne.s32.totalorder %s134, %s137
      %p143 = scmp.eq.s32.totalorder %s14, 0
      %p144 = por %p142, %p143
      %p145 = scmp.ne.s32.totalorder %s134, %s137
      %p146 = scmp.eq.s32.totalorder %s19, 1
      %p147 = por %p145, %p146
      %p148 = scmp.ne.s32.totalorder %s137, %s138
      %p149 = scmp.eq.s32.totalorder %s19, 0
      %p150 = por %p148, %p149
      %p151 = scmp.ne.s32.totalorder %s137, %s138
      %p152 = scmp.eq.s32.totalorder %s20, 1
      %p153 = por %p151, %p152
      %p155 = scmp.ne.s32.totalorder %s138, %s154
      %p156 = scmp.eq.s32.totalorder %s20, 0
      %p157 = por %p155, %p156
      %p158 = scmp.le.s32.totalorder 1, %s14
      %p159 = scmp.lt.s32.totalorder %s14, 3
      %p160 = pnand %p158, %p159
      %p161 = pneg %p160
      // Predicated region
      $region9: #{tpu_custom_call.1} parent=5 // pred_check
        _
      $region10: #{tpu_custom_call.1} parent=5 // pred_check_branch
        %163 = sbr.rel (%p160) target = $region12
      $region11: #{tpu_custom_call.1} parent=5 // pred_region
        %s164 = ssub.s32 %s14, 1
        // Predicated region
        $region13: #{tpu_custom_call.1} parent=11 // pred_check
          %p165 = pneg %p61
        $region14: #{tpu_custom_call.1} parent=11 // pred_check_branch
          %167 = sbr.rel (%p165) target = $region16
        $region15: #{tpu_custom_call.1} parent=11 // pred_region
          _
        $region16: #{tpu_custom_call.1} parent=11 // pred_fallthru
          _
        // Predicated region
        $region17: #{tpu_custom_call.1} parent=11 // pred_check
          %p168 = pneg %p82
        $region18: #{tpu_custom_call.1} parent=11 // pred_check_branch
          %170 = sbr.rel (%p168) target = $region20
        $region19: #{tpu_custom_call.1} parent=11 // pred_region
          _
        $region20: #{tpu_custom_call.1} parent=11 // pred_fallthru
          _
        // Predicated region
        $region21: #{tpu_custom_call.1} parent=11 // pred_check
          %p171 = pneg %p103
        $region22: #{tpu_custom_call.1} parent=11 // pred_check_branch
          %173 = sbr.rel (%p171) target = $region24
        $region23: #{tpu_custom_call.1} parent=11 // pred_region
          _
        $region24: #{tpu_custom_call.1} parent=11 // pred_fallthru
          _
        // Predicated region
        $region25: #{tpu_custom_call.1} parent=11 // pred_check
          %p174 = pneg %p124
        $region26: #{tpu_custom_call.1} parent=11 // pred_check_branch
          %176 = sbr.rel (%p174) target = $region28
        $region27: #{tpu_custom_call.1} parent=11 // pred_region
          _
        $region28: #{tpu_custom_call.1} parent=11 // pred_fallthru
          _
      $region12: #{tpu_custom_call.1} parent=5 // pred_fallthru
        _
      %p177 = scmp.lt.s32.totalorder %s14, 2
      // Predicated region
      $region29: #{tpu_custom_call.1} parent=5 // pred_check
        %p178 = pneg %p177
      $region30: #{tpu_custom_call.1} parent=5 // pred_check_branch
        %180 = sbr.rel (%p178) target = $region32
      $region31: #{tpu_custom_call.1} parent=5 // pred_region
        // Predicated region
        $region33: #{tpu_custom_call.1} parent=31 // pred_check
          %p181 = pneg %p34
        $region34: #{tpu_custom_call.1} parent=31 // pred_check_branch
          %183 = sbr.rel (%p181) target = $region36
        $region35: #{tpu_custom_call.1} parent=31 // pred_region
          %p184 = scmp.lt.s32.totalorder %s14, 1
          %s185 = scalar_select %p184, %s14, 1
          %s186 = smul.addr %s185, 4
          %s187 = sadd.s32 2, %s186
          %s188 = smul.addr %s187, 4
          %s189 = scalar_lea.vmem %s0, %s188
        $region36: #{tpu_custom_call.1} parent=31 // pred_fallthru
          _
      $region32: #{tpu_custom_call.1} parent=5 // pred_fallthru
        _
      %p190 = scmp.le.s32.totalorder 1, %s14
      %p191 = scmp.lt.s32.totalorder %s14, 3
      %p192 = pnand %p190, %p191
      %p193 = pneg %p192
      // Predicated region
      $region37: #{tpu_custom_call.1} parent=5 // pred_check
        _
      $region38: #{tpu_custom_call.1} parent=5 // pred_check_branch
        %195 = sbr.rel (%p192) target = $region40
      $region39: #{tpu_custom_call.1} parent=5 // pred_region
        %s196 = ssub.s32 %s14, 1
        %p197 = scmp.lt.s32.totalorder %s19, 1
        %s198 = scalar_select %p197, %s19, 1
        %s199 = smul.addr %s198, 4
        %s200 = sadd.s32 2, %s199
        %s201 = smul.addr %s200, 4
        %s202 = scalar_lea.vmem %s0, %s201
        %p203 = pneg %p40
        %p204 = pneg %p37
        %p205 = pneg %p61
        %p206 = pneg %p58
        %p207 = pneg %p82
        %p208 = pneg %p79
        %p209 = pneg %p103
        %p210 = pneg %p100
        %p211 = pneg %p124
        %p212 = pneg %p121
        %p213 = pneg %p150
        %p214 = pneg %p147
        %s215 = sand.u32 %s137, 1
        %s216 = scalar_lea.sflag [#allocation4], %s215
        %s217 = sand.u32 %s137, 1
        %s218 = smul.addr %s217, 8
        %s219 = scalar_lea.vmem [#allocation3], %s218
        %p220 = scmp.lt.s32.totalorder %s19, 1
        %s221 = scalar_select %p220, %s19, 1
        %s222 = smul.addr %s221, 4
        %s223 = sadd.s32 2, %s222
        %s224 = smul.addr %s223, 4
        %s225 = scalar_lea.vmem %s0, %s224
        %v226 = vlaneseq
        %v227 = vand.u32 %v226, 127
        %v228 = vadd.s32 %v227, 128
        %vm229 = vcmp.lt.s32.totalorder %v227, 0
        %v230 = vsub.s32 0, %v227
        %v231 = vsel %vm229, %v230, %v227
        %v232 = vshrl.u32 %v231, 4
        %v233 = vand.u32 %v231, 15
        %v234 = vsub.s32 0, %v233
        %v235 = vsel %vm229, %v234, %v233
        %vm236 = vcmp.lt.s32.totalorder %v228, 0
        %v237 = vsub.s32 0, %v228
        %v238 = vsel %vm236, %v237, %v228
        %v239 = vshrl.u32 %v238, 4
        %v240 = vand.u32 %v238, 15
        %v241 = vsub.s32 0, %v240
        %v242 = vsel %vm236, %v241, %v240
        %vm243 = vcmp.ne.s32.totalorder %v235, 0
        %vm244 = vcmp.ne.s32.totalorder %v242, 0
        %vm245 = vcmp.lt.s32.totalorder %v235, 0
        %vm246 = vcmp.lt.s32.totalorder %v242, 0
        %vm247 = vmand %vm245, %vm243
        %vm248 = vmand %vm246, %vm244
        %v249 = vadd.s32 %v235, 16
        %v250 = vadd.s32 %v242, 16
        %v251 = vsel %vm247, %v249, %v235
        %v252 = vsel %vm248, %v250, %v242
        %vm253 = vcmp.ge.s32.totalorder %v251, 1
        %vm254 = vcmp.ge.s32.totalorder %v252, 1
        %vm255 = vcmp.le.s32.totalorder %v251, 14
        %vm256 = vcmp.le.s32.totalorder %v252, 14
        %257 = vst [vmem:[#allocation2] sm:$0xf] 0.0
        %258 = vst [vmem:[#allocation2 + $0xc] sm:$0xf] 0.0
        %v259 = vld [vmem:[%s4] sm:$0xf]
        %s260 = scalar_lea.vmem %s4, 4
        %v261 = vld [vmem:[%s260] sm:$0xf]
        %s262 = scalar_lea.vmem %s4, 8
        %v263 = vld [vmem:[%s262] sm:$0xf]
        %v264 = vld [vmem:[%s1] sm:$0xf]
        %v265 = vld [vmem:[%s3] sm:$0xf]
        %v266 = vld [vmem:[%s225] sm:$0xff]
        %268 = vset.pattern.permute.xlu0 0
        %269 = vperm.xlu0 %268, %v259
        %v270 = vpop.permute.xlu0 %269
        %v273 = vcombine.high %v266, %v266
        %vm274 = vcmask 31744
        %v276 = vsel %vm274, %v264, 0
        %vm278 = vcmask 1043456
        %v279 = vsel %vm278, %v266, 0
        %v281 = vsel %vm278, %v273, 0
        %283 = vmatprep.subr.mxu0 %v281
        %284 = vmatpush1.msra.mxu0 %v279
        %285 = vmatprep.subr.mxu0 0.0
        %286 = vmatpush1.msra.mxu0 0.0
        %287 = vmatprep.subr.mxu0 0.0
        %288 = vmatpush1.msra.mxu0 0.0
        %289 = vmatprep.subr.mxu0 0.0
        %290 = vmatpush1.msra.mxu0 0.0
        %291 = vmatprep.subr.mxu0 0.0
        %292 = vmatpush1.msra.mxu0 0.0
        %293 = vmatprep.subr.mxu0 0.0
        %294 = vmatpush1.msra.mxu0 0.0
        %295 = vmatprep.subr.mxu0 0.0
        %296 = vmatpush1.msra.mxu0 0.0
        %297 = vmatprep.subr.mxu0 0.0
        %298 = vmatpush1.msra.mxu0 0.0
        %299 = vmatprep.subr.mxu0 0.0
        %300 = vmatpush1.msra.mxu0 0.0
        %301 = vmatprep.subr.mxu0 0.0
        %302 = vmatpush1.msra.mxu0 0.0
        %303 = vmatprep.subr.mxu0 0.0
        %304 = vmatpush1.msra.mxu0 0.0
        %305 = vmatprep.subr.mxu0 0.0
        %306 = vmatpush1.msra.mxu0 0.0
        %307 = vmatprep.subr.mxu0 0.0
        %308 = vmatpush1.msra.mxu0 0.0
        %309 = vmatprep.subr.mxu0 0.0
        %310 = vmatpush1.msra.mxu0 0.0
        %311 = vmatprep.subr.mxu0 0.0
        %312 = vmatpush1.msra.mxu0 0.0
        %313 = vmatprep.subr.mxu0 0.0
        %314 = vmatpush1.msra.mxu0 0.0
        %315 = vmatprep.subr.mxu0 0.0
        %316 = vmatpush1.msra.mxu0 0.0
        %317 = vmatprep.subr.mxu0 0.0
        %318 = vmatpush1.msra.mxu0 0.0
        %319 = vmatprep.subr.mxu0 0.0
        %320 = vmatpush1.msra.mxu0 0.0
        %321 = vmatprep.subr.mxu0 0.0
        %322 = vmatpush1.msra.mxu0 0.0
        %323 = vmatprep.subr.mxu0 0.0
        %324 = vmatpush1.msra.mxu0 0.0
        %325 = vmatprep.subr.mxu0 0.0
        %326 = vmatpush1.msra.mxu0 0.0
        %327 = vmatprep.subr.mxu0 0.0
        %328 = vmatpush1.msra.mxu0 0.0
        %329 = vmatprep.subr.mxu0 0.0
        %330 = vmatpush1.msra.mxu0 0.0
        %331 = vmatprep.subr.mxu0 0.0
        %332 = vmatpush1.msra.mxu0 0.0
        %333 = vmatprep.subr.mxu0 0.0
        %334 = vmatpush1.msra.mxu0 0.0
        %335 = vmatprep.subr.mxu0 0.0
        %336 = vmatpush1.msra.mxu0 0.0
        %337 = vmatprep.subr.mxu0 0.0
        %338 = vmatpush1.msra.mxu0 0.0
        %339 = vmatprep.subr.mxu0 0.0
        %340 = vmatpush1.msra.mxu0 0.0
        %341 = vmatprep.subr.mxu0 0.0
        %342 = vmatpush1.msra.mxu0 0.0
        %343 = vmatprep.subr.mxu0 0.0
        %344 = vmatpush1.msra.mxu0 0.0
        %345 = vmatprep.subr.mxu0 0.0
        %346 = vmatpush1.msra.mxu0 0.0
        %347 = vmatprep.mubr.f32.mxu0 0.0
        %348 = vmatmul.mubr.f32.gmra.mrb[0].mxu0 %v276
        %v349 = vpop.f32.mrb[0].mxu0
        %v350 = vadd.f32 %v270, %v349
        %v351 = vpop.f32.mrb[0].mxu0
        %v352 = vadd.f32 %v270, %v351
        %353 = vdwg.mxu0
        %v354 = vmax.f32 %v350, 0.0
        %v355 = vmax.f32 %v352, 0.0
        %v358 = vcombine.low %v354, %v355
        %360 = vst [vmem:[#allocation2 + $0x4] sm:$0xff] %v358
        %v361 = vld [vmem:[#allocation2] sm:$0xff]
        %v362 = vld [vmem:[#allocation2 + $0x8] sm:$0xf]
        %v365 = vcombine.high %v361, %v361
        %366 = vrot.lane.b32.xlu0 %v361, 17
        %v367 = vpop.permute.xlu0 %366
        %368 = vrot.lane.b32.xlu0 %v365, 17
        %v369 = vpop.permute.xlu0 %368
        %370 = vrot.lane.b32.xlu0 %v362, 17
        %v371 = vpop.permute.xlu0 %370
        %vm372 = vcmask 138240
        %v373 = vsel %vm372, %v367, %v369
        %v374 = vsel %vm372, %v369, %v371
        %v377 = vsel %vm253, %v373, 0.0
        %v378 = vsel %vm254, %v374, 0.0
        %v379 = vld [vmem:[%s2] sm:$0xf]
        %381 = vset.pattern.permute.xlu0 0
        %382 = vperm.xlu0 %381, %v379
        %v383 = vpop.permute.xlu0 %382
        %v385 = vmul.f32 %v383, %v377
        %v386 = vmul.f32 %v383, %v378
        %v387 = vadd.f32 %v385, 0.0
        %v388 = vadd.f32 %v386, 0.0
        %v389 = vld [vmem:[#allocation2] sm:$0xff]
        %v390 = vld [vmem:[#allocation2 + $0x8] sm:$0xf]
        %s391 = scalar_lea.vmem %s2, 4
        %v392 = vld [vmem:[%s391] sm:$0xf]
        %394 = vset.pattern.permute.xlu0 0
        %395 = vperm.xlu0 %394, %v392
        %v396 = vpop.permute.xlu0 %395
        %v400 = vcombine.high %v389, %v389
        %401 = vrot.lane.b32.xlu0 %v389, 16
        %v402 = vpop.permute.xlu0 %401
        %403 = vrot.lane.b32.xlu0 %v400, 16
        %v404 = vpop.permute.xlu0 %403
        %405 = vrot.lane.b32.xlu0 %v390, 16
        %v406 = vpop.permute.xlu0 %405
        %vm407 = vcmask 130048
        %v408 = vsel %vm407, %v402, %v404
        %v409 = vsel %vm407, %v404, %v406
        %v412 = vmul.f32 %v396, %v408
        %v413 = vmul.f32 %v396, %v409
        %v414 = vadd.f32 %v387, %v412
        %v415 = vadd.f32 %v388, %v413
        %v416 = vld [vmem:[#allocation2] sm:$0xff]
        %v417 = vld [vmem:[#allocation2 + $0x8] sm:$0xf]
        %v420 = vcombine.high %v416, %v416
        %421 = vrot.lane.b32.xlu0 %v416, 15
        %v422 = vpop.permute.xlu0 %421
        %423 = vrot.lane.b32.xlu0 %v420, 15
        %v424 = vpop.permute.xlu0 %423
        %425 = vrot.lane.b32.xlu0 %v417, 15
        %v426 = vpop.permute.xlu0 %425
        %vm427 = vcmask 121856
        %v428 = vsel %vm427, %v422, %v424
        %v429 = vsel %vm427, %v424, %v426
        %v432 = vsel %vm255, %v428, 0.0
        %v433 = vsel %vm256, %v429, 0.0
        %s434 = scalar_lea.vmem %s2, 8
        %v435 = vld [vmem:[%s434] sm:$0xf]
        %437 = vset.pattern.permute.xlu0 0
        %438 = vperm.xlu0 %437, %v435
        %v439 = vpop.permute.xlu0 %438
        %v441 = vmul.f32 %v439, %v432
        %v442 = vmul.f32 %v439, %v433
        %v443 = vadd.f32 %v414, %v441
        %v444 = vadd.f32 %v415, %v442
        %v445 = vld [vmem:[#allocation2] sm:$0xff]
        %v446 = vld [vmem:[#allocation2 + $0x8] sm:$0xf]
        %v449 = vcombine.high %v445, %v445
        %450 = vrot.lane.b32.xlu0 %v445, 1
        %v451 = vpop.permute.xlu0 %450
        %452 = vrot.lane.b32.xlu0 %v449, 1
        %v453 = vpop.permute.xlu0 %452
        %454 = vrot.lane.b32.xlu0 %v446, 1
        %v455 = vpop.permute.xlu0 %454
        %vm456 = vcmask 7168
        %v457 = vsel %vm456, %v451, %v453
        %v458 = vsel %vm456, %v453, %v455
        %v461 = vsel %vm253, %v457, 0.0
        %v462 = vsel %vm254, %v458, 0.0
        %s463 = scalar_lea.vmem %s2, 12
        %v464 = vld [vmem:[%s463] sm:$0xf]
        %466 = vset.pattern.permute.xlu0 0
        %467 = vperm.xlu0 %466, %v464
        %v468 = vpop.permute.xlu0 %467
        %v470 = vmul.f32 %v468, %v461
        %v471 = vmul.f32 %v468, %v462
        %v472 = vadd.f32 %v443, %v470
        %v473 = vadd.f32 %v444, %v471
        %v474 = vld [vmem:[#allocation2 + $0x4] sm:$0xff]
        %s475 = scalar_lea.vmem %s2, 16
        %v476 = vld [vmem:[%s475] sm:$0xf]
        %478 = vset.pattern.permute.xlu0 0
        %479 = vperm.xlu0 %478, %v476
        %v480 = vpop.permute.xlu0 %479
        %v483 = vcombine.high %v474, %v474
        %v485 = vmul.f32 %v480, %v474
        %v486 = vmul.f32 %v480, %v483
        %v487 = vadd.f32 %v472, %v485
        %v488 = vadd.f32 %v473, %v486
        %v489 = vld [vmem:[#allocation2 + $0x4] sm:$0xff]
        %v490 = vld [vmem:[#allocation2 + $0xc] sm:$0xf]
        %v493 = vcombine.high %v489, %v489
        %494 = vrot.lane.b32.xlu0 %v489, 127
        %v495 = vpop.permute.xlu0 %494
        %496 = vrot.lane.b32.xlu0 %v493, 127
        %v497 = vpop.permute.xlu0 %496
        %498 = vrot.lane.b32.xlu0 %v490, 127
        %v499 = vpop.permute.xlu0 %498
        %vm500 = vcmask 1039360
        %v501 = vsel %vm500, %v495, %v497
        %v502 = vsel %vm500, %v497, %v499
        %v505 = vsel %vm255, %v501, 0.0
        %v506 = vsel %vm256, %v502, 0.0
        %s507 = scalar_lea.vmem %s2, 20
        %v508 = vld [vmem:[%s507] sm:$0xf]
        %510 = vset.pattern.permute.xlu0 0
        %511 = vperm.xlu0 %510, %v508
        %v512 = vpop.permute.xlu0 %511
        %v514 = vmul.f32 %v512, %v505
        %v515 = vmul.f32 %v512, %v506
        %v516 = vadd.f32 %v487, %v514
        %v517 = vadd.f32 %v488, %v515
        %v518 = vld [vmem:[#allocation2 + $0x4] sm:$0xff]
        %v519 = vld [vmem:[#allocation2 + $0xc] sm:$0xf]
        %v522 = vcombine.high %v518, %v518
        %523 = vrot.lane.b32.xlu0 %v518, 113
        %v524 = vpop.permute.xlu0 %523
        %525 = vrot.lane.b32.xlu0 %v522, 113
        %v526 = vpop.permute.xlu0 %525
        %527 = vrot.lane.b32.xlu0 %v519, 113
        %v528 = vpop.permute.xlu0 %527
        %vm529 = vcmask 924672
        %v530 = vsel %vm529, %v524, %v526
        %v531 = vsel %vm529, %v526, %v528
        %v534 = vsel %vm253, %v530, 0.0
        %v535 = vsel %vm254, %v531, 0.0
        %s536 = scalar_lea.vmem %s2, 24
        %v537 = vld [vmem:[%s536] sm:$0xf]
        %539 = vset.pattern.permute.xlu0 0
        %540 = vperm.xlu0 %539, %v537
        %v541 = vpop.permute.xlu0 %540
        %v543 = vmul.f32 %v541, %v534
        %v544 = vmul.f32 %v541, %v535
        %v545 = vadd.f32 %v516, %v543
        %v546 = vadd.f32 %v517, %v544
        %v547 = vld [vmem:[#allocation2 + $0x4] sm:$0xff]
        %v548 = vld [vmem:[#allocation2 + $0xc] sm:$0xf]
        %s549 = scalar_lea.vmem %s2, 28
        %v550 = vld [vmem:[%s549] sm:$0xf]
        %552 = vset.pattern.permute.xlu0 0
        %553 = vperm.xlu0 %552, %v550
        %v554 = vpop.permute.xlu0 %553
        %v558 = vcombine.high %v547, %v547
        %559 = vrot.lane.b32.xlu0 %v547, 112
        %v560 = vpop.permute.xlu0 %559
        %561 = vrot.lane.b32.xlu0 %v558, 112
        %v562 = vpop.permute.xlu0 %561
        %563 = vrot.lane.b32.xlu0 %v548, 112
        %v564 = vpop.permute.xlu0 %563
        %vm565 = vcmask 916480
        %v566 = vsel %vm565, %v560, %v562
        %v567 = vsel %vm565, %v562, %v564
        %v570 = vmul.f32 %v554, %v566
        %v571 = vmul.f32 %v554, %v567
        %v572 = vadd.f32 %v545, %v570
        %v573 = vadd.f32 %v546, %v571
        %v574 = vld [vmem:[#allocation2 + $0x4] sm:$0xff]
        %v575 = vld [vmem:[#allocation2 + $0xc] sm:$0xf]
        %v578 = vcombine.high %v574, %v574
        %579 = vrot.lane.b32.xlu0 %v574, 111
        %v580 = vpop.permute.xlu0 %579
        %581 = vrot.lane.b32.xlu0 %v578, 111
        %v582 = vpop.permute.xlu0 %581
        %583 = vrot.lane.b32.xlu0 %v575, 111
        %v584 = vpop.permute.xlu0 %583
        %vm585 = vcmask 908288
        %v586 = vsel %vm585, %v580, %v582
        %v587 = vsel %vm585, %v582, %v584
        %v590 = vsel %vm255, %v586, 0.0
        %v591 = vsel %vm256, %v587, 0.0
        %s592 = scalar_lea.vmem %s2, 32
        %v593 = vld [vmem:[%s592] sm:$0xf]
        %595 = vset.pattern.permute.xlu0 0
        %596 = vperm.xlu0 %595, %v593
        %v597 = vpop.permute.xlu0 %596
        %v599 = vmul.f32 %v597, %v590
        %v600 = vmul.f32 %v597, %v591
        %v601 = vadd.f32 %v572, %v599
        %v602 = vadd.f32 %v573, %v600
        %604 = vset.pattern.permute.xlu0 0
        %605 = vperm.xlu0 %604, %v261
        %v606 = vpop.permute.xlu0 %605
        %v608 = vadd.f32 %v601, %v606
        %v609 = vadd.f32 %v602, %v606
        %611 = vset.pattern.permute.xlu0 0
        %612 = vperm.xlu0 %611, %v263
        %v613 = vpop.permute.xlu0 %612
        %v616 = vsel %vm274, %v265, 0
        %v619 = vsel %vm278, %v608, 0
        %v622 = vsel %vm278, %v609, 0
        %624 = vmatprep.subr.mxu0 %v622
        %625 = vmatpush1.msra.mxu0 %v619
        %626 = vmatprep.subr.mxu0 0.0
        %627 = vmatpush1.msra.mxu0 0.0
        %628 = vmatprep.subr.mxu0 0.0
        %629 = vmatpush1.msra.mxu0 0.0
        %630 = vmatprep.subr.mxu0 0.0
        %631 = vmatpush1.msra.mxu0 0.0
        %632 = vmatprep.subr.mxu0 0.0
        %633 = vmatpush1.msra.mxu0 0.0
        %634 = vmatprep.subr.mxu0 0.0
        %635 = vmatpush1.msra.mxu0 0.0
        %636 = vmatprep.subr.mxu0 0.0
        %637 = vmatpush1.msra.mxu0 0.0
        %638 = vmatprep.subr.mxu0 0.0
        %639 = vmatpush1.msra.mxu0 0.0
        %640 = vmatprep.subr.mxu0 0.0
        %641 = vmatpush1.msra.mxu0 0.0
        %642 = vmatprep.subr.mxu0 0.0
        %643 = vmatpush1.msra.mxu0 0.0
        %644 = vmatprep.subr.mxu0 0.0
        %645 = vmatpush1.msra.mxu0 0.0
        %646 = vmatprep.subr.mxu0 0.0
        %647 = vmatpush1.msra.mxu0 0.0
        %648 = vmatprep.subr.mxu0 0.0
        %649 = vmatpush1.msra.mxu0 0.0
        %650 = vmatprep.subr.mxu0 0.0
        %651 = vmatpush1.msra.mxu0 0.0
        %652 = vmatprep.subr.mxu0 0.0
        %653 = vmatpush1.msra.mxu0 0.0
        %654 = vmatprep.subr.mxu0 0.0
        %655 = vmatpush1.msra.mxu0 0.0
        %656 = vmatprep.subr.mxu0 0.0
        %657 = vmatpush1.msra.mxu0 0.0
        %658 = vmatprep.subr.mxu0 0.0
        %659 = vmatpush1.msra.mxu0 0.0
        %660 = vmatprep.subr.mxu0 0.0
        %661 = vmatpush1.msra.mxu0 0.0
        %662 = vmatprep.subr.mxu0 0.0
        %663 = vmatpush1.msra.mxu0 0.0
        %664 = vmatprep.subr.mxu0 0.0
        %665 = vmatpush1.msra.mxu0 0.0
        %666 = vmatprep.subr.mxu0 0.0
        %667 = vmatpush1.msra.mxu0 0.0
        %668 = vmatprep.subr.mxu0 0.0
        %669 = vmatpush1.msra.mxu0 0.0
        %670 = vmatprep.subr.mxu0 0.0
        %671 = vmatpush1.msra.mxu0 0.0
        %672 = vmatprep.subr.mxu0 0.0
        %673 = vmatpush1.msra.mxu0 0.0
        %674 = vmatprep.subr.mxu0 0.0
        %675 = vmatpush1.msra.mxu0 0.0
        %676 = vmatprep.subr.mxu0 0.0
        %677 = vmatpush1.msra.mxu0 0.0
        %678 = vmatprep.subr.mxu0 0.0
        %679 = vmatpush1.msra.mxu0 0.0
        %680 = vmatprep.subr.mxu0 0.0
        %681 = vmatpush1.msra.mxu0 0.0
        %682 = vmatprep.subr.mxu0 0.0
        %683 = vmatpush1.msra.mxu0 0.0
        %684 = vmatprep.subr.mxu0 0.0
        %685 = vmatpush1.msra.mxu0 0.0
        %686 = vmatprep.subr.mxu0 0.0
        %687 = vmatpush1.msra.mxu0 0.0
        %688 = vmatprep.mubr.f32.mxu0 0.0
        %689 = vmatmul.mubr.f32.gmra.mrb[0].mxu0 %v616
        %v690 = vpop.f32.mrb[0].mxu0
        %v691 = vadd.f32 %v613, %v690
        %v692 = vpop.f32.mrb[0].mxu0
        %v693 = vadd.f32 %v613, %v692
        %694 = vdwg.mxu0
        %v695 = vmax.f32 %v691, 0.0
        %v696 = vmax.f32 %v693, 0.0
        %v699 = vcombine.low %v695, %v696
        %701 = vst [vmem:[%s219] sm:$0xff] %v699
        %s702 = sand.u32 %s137, 1
        %s703 = scalar_lea.sflag [#allocation4], %s702
        %s704 = sand.u32 %s137, 1
        %s705 = smul.addr %s704, 8
        %s706 = scalar_lea.vmem [#allocation3], %s705
        // Predicated region
        $region41: #{tpu_custom_call.1} parent=39 // pred_check
          %p707 = pneg %p147
        $region42: #{tpu_custom_call.1} parent=39 // pred_check_branch
          %709 = sbr.rel (%p707) target = $region44
        $region43: #{tpu_custom_call.1} parent=39 // pred_region
          %s711 = ssub.s32 128, 128
          %712 = vsyncadd %s703, %s711
          %s713 = smul.addr %s19, 2
          %s714 = smul.addr %s713, 64
          %s715 = scalar_lea.hbm %s5, %s714
          %s717 = sshll.u32 %s706, 4
          %s718 = int_to_ptr.vmem [resolvable:$true] %s717
          %720 = dma.vmem_to_hbm [thread:$0]  %s718, 128, %s715, %s703
        $region44: #{tpu_custom_call.1} parent=39 // pred_fallthru
          _
      $region40: #{tpu_custom_call.1} parent=5 // pred_fallthru
        _
      %p721 = scmp.le.s32.totalorder 2, %s14
      // Predicated region
      $region45: #{tpu_custom_call.1} parent=5 // pred_check
        %p722 = pneg %p721
      $region46: #{tpu_custom_call.1} parent=5 // pred_check_branch
        %724 = sbr.rel (%p722) target = $region48
      $region47: #{tpu_custom_call.1} parent=5 // pred_region
        %s725 = ssub.s32 %s14, 2
        // Predicated region
        $region49: #{tpu_custom_call.1} parent=47 // pred_check
          %p726 = pneg %p153
        $region50: #{tpu_custom_call.1} parent=47 // pred_check_branch
          %728 = sbr.rel (%p726) target = $region52
        $region51: #{tpu_custom_call.1} parent=47 // pred_region
          %s729 = sand.u32 %s138, 1
          %s730 = scalar_lea.sflag [#allocation4], %s729
          %s731 = sand.u32 %s138, 1
          %s732 = smul.addr %s731, 8
          %s733 = scalar_lea.vmem [#allocation3], %s732
          %734 = dma.done %s730, 128
        $region52: #{tpu_custom_call.1} parent=47 // pred_fallthru
          _
      $region48: #{tpu_custom_call.1} parent=5 // pred_fallthru
        _
    $region6: #{tpu_custom_call.1} parent=1 // loop_footer
      %s18 = sadd.s32 1, %s14
    $region7: #{tpu_custom_call.1} parent=1 // loop_footer_branch
      %13 = sbr.rel target = $region3
    $region8: #{tpu_custom_call.1} parent=1 // loop_exit
      _
    %735 = vsyncpa [#allocation4], 1
    %s736 = scalar_lea.sflag [#allocation4], 1
    %737 = vsyncpa %s736, 1

</llo_original>
